<compile_context>
chip_gen: v5e
topology: v5e:2x2
jax: 0.10.0
libtpu: 0.0.40
codegen_flags: <defaults>
</compile_context>

<pallas_src>
import functools
import math

import jax
import jax.numpy as jnp
from jax import lax
from jax.experimental import pallas as pl
from jax.experimental.pallas import tpu as pltpu

_MAX_INFLIGHT = 32                     # outstanding row DMAs (power of two)
_ISSUE_UNROLL = 8                      # partial unroll of the DMA-issue loop
_VMEM_TABLE_BYTES = 16 * 1024 * 1024   # table <= this (tile-padded) -> VMEM fast path
_OUT_BUF_BYTES = 8 * 1024 * 1024       # budget for the double-buffered output block
_VMEM_LIMIT_BYTES = 40 * 1024 * 1024   # > v5e/v6e scoped defaults, < v7x physical


def _round_up(x, m):
    return (x + m - 1) // m * m


# ---------------------------------------------------------------------------
# Fast path: whole (unpadded) table resident in VMEM; gather each token block
# with a one-hot MXU matmul (no per-row DMA descriptor overhead).
# ---------------------------------------------------------------------------
def _embed_vmem_kernel(ids_ref, table_ref, out_ref, *, scale, vocab):
    ids = ids_ref[...]                                            # (tb, 1) int32
    iota = lax.broadcasted_iota(jnp.int32, (ids.shape[0], vocab), 1)
    onehot = (iota == ids).astype(table_ref.dtype)                # (tb, vocab)
    gathered = jnp.dot(onehot, table_ref[...],
                       preferred_element_type=jnp.float32)        # (tb, d) f32
    out_ref[...] = (gathered * scale).astype(out_ref.dtype)


# ---------------------------------------------------------------------------
# HBM path: table stays (unpadded) in HBM; per-row async copies land directly
# in the output block, with up to _MAX_INFLIGHT copies in flight.
# ---------------------------------------------------------------------------
def _embed_hbm_kernel(ids_ref, table_ref, out_ref, sems, *, scale, token_block):
    # ids_ref:   SMEM (tb,) int32       per-block token ids
    # table_ref: HBM  (vocab, d)        embedding table (never made VMEM-resident)
    # out_ref:   VMEM (tb, d)           output block (DMA destination + scale in place)
    def row_copy(src_row, dst_row, slot):
        return pltpu.make_async_copy(
            table_ref.at[pl.ds(src_row, 1), :],
            out_ref.at[pl.ds(dst_row, 1), :],
            sems.at[slot],
        )

    def issue(t, carry):
        row = ids_ref[t]                      # id read hoisted ABOVE the wait
        slot = t & (_MAX_INFLIGHT - 1)

        @pl.when(t >= _MAX_INFLIGHT)
        def _retire():                        # recycle this semaphore slot
            row_copy(0, t - _MAX_INFLIGHT, slot).wait()

        row_copy(row, t, slot).start()
        return carry

    lax.fori_loop(0, token_block, issue, 0, unroll=_ISSUE_UNROLL)

    # Drain copies still in flight.  Every copy has the identical (1, d) shape,
    # so a dummy descriptor (src_row=0) is a valid wait.
    n_drain = min(token_block, _MAX_INFLIGHT)
    tail = max(token_block - _MAX_INFLIGHT, 0)

    def drain(s, carry):
        row_copy(0, tail + s, s).wait()
        return carry

    lax.fori_loop(0, n_drain, drain, 0, unroll=True)

    # Scale in the native dtype (bf16-native on v6e/v7x; on v5e the compiler
    # upconverts to f32 itself).
    out_ref[...] = out_ref[...] * jnp.asarray(scale, dtype=out_ref.dtype)


def embeddings_forward(x_ids, table, *, token_block=256,
                       max_vmem_table_bytes=_VMEM_TABLE_BYTES):
    """Pallas equivalent of Embeddings.forward: table[x_ids] * sqrt(d_model)."""
    vocab, d_model = table.shape
    lead_shape = x_ids.shape
    N = math.prod(lead_shape)
    dtype = table.dtype
    itemsize = jnp.dtype(dtype).itemsize
    scale = float(math.sqrt(d_model))

    # Packed sublane count for this dtype (f32: 8, bf16: 16, int8/fp8: 32).
    packing = max(8, 32 // itemsize)

    # Token block: multiple of `packing`, capped by the output double-buffer
    # VMEM budget, shrunk so the grid has >= 2 steps (v7x megacore) when the
    # token count allows it.
    tb = _round_up(max(packing, min(int(token_block), max(N, 1))), packing)
    tb_budget = max(packing,
                    (_OUT_BUF_BYTES // (2 * d_model * itemsize)) // packing * packing)
    half = _round_up(max(1, -(-N // 2)), packing)
    tb = max(packing, min(tb, tb_budget, half))
    n_pad = _round_up(N, tb)
    grid = (n_pad // tb,)

    # Flat int32 ids.  Out-of-range ids are clamped so the row read stays in
    # bounds (PyTorch nn.Embedding would raise).  Pad tokens gather row 0.
    ids_flat = jnp.clip(x_ids.reshape(-1).astype(jnp.int32), 0, vocab - 1)
    if n_pad != N:
        ids_flat = jnp.pad(ids_flat, (0, n_pad - N))

    table_vmem_bytes = _round_up(vocab, packing) * _round_up(d_model, 128) * itemsize
    params = pltpu.CompilerParams(
        dimension_semantics=("parallel",),          # shards over v7x's 2 TCs
        vmem_limit_bytes=_VMEM_LIMIT_BYTES,
    )
    out_shape = jax.ShapeDtypeStruct((n_pad, d_model), dtype)
    out_spec = pl.BlockSpec((tb, d_model), lambda i: (i, 0))

    if table_vmem_bytes <= max_vmem_table_bytes:
        # VMEM-resident fast path (small / medium tables).
        out_flat = pl.pallas_call(
            functools.partial(_embed_vmem_kernel, scale=scale, vocab=vocab),
            out_shape=out_shape,
            grid=grid,
            in_specs=[
                pl.BlockSpec((tb, 1), lambda i: (i, 0)),            # ids (VMEM)
                pl.BlockSpec((vocab, d_model), lambda i: (0, 0)),   # whole table in VMEM
            ],
            out_specs=out_spec,
            compiler_params=params,
        )(ids_flat.reshape(n_pad, 1), table)
    else:
        # HBM-resident gather path (large tables).
        out_flat = pl.pallas_call(
            functools.partial(_embed_hbm_kernel, scale=scale, token_block=tb),
            out_shape=out_shape,
            grid=grid,
            in_specs=[
                pl.BlockSpec((tb,), lambda i: (i,),
                             memory_space=pltpu.MemorySpace.SMEM),  # per-block ids
                pl.BlockSpec(memory_space=pl.ANY),                  # table stays in HBM
            ],
            out_specs=out_spec,
            scratch_shapes=[pltpu.SemaphoreType.DMA((_MAX_INFLIGHT,))],
            compiler_params=params,
        )(ids_flat, table)

    if n_pad != N:
        out_flat = out_flat[:N]
    return out_flat.reshape(*lead_shape, d_model)


if __name__ == "__main__":
    # Small shapes consistent with the module: batch=2, seq=8, vocab=32, d_model=32.
    B, S, vocab, d_model = 2, 8, 32, 32

    key = jax.random.PRNGKey(0)
    k_tab, k_ids = jax.random.split(key)

    table = jax.random.normal(k_tab, (vocab, d_model), dtype=jnp.float32)
    x_ids = jax.random.randint(k_ids, (B, S), 0, vocab, dtype=jnp.int32)

    ref = table[x_ids] * math.sqrt(d_model)

    # Fast path: table resident in VMEM (one-hot MXU gather).
    out_fast = jax.block_until_ready(embeddings_forward(x_ids, table, token_block=8))
    # Forced HBM path: table kept in HBM, per-row async-copy gather.
    out_hbm = jax.block_until_ready(
        embeddings_forward(x_ids, table, token_block=8, max_vmem_table_bytes=0))

    assert out_fast.shape == (B, S, d_model)
    assert out_hbm.shape == (B, S, d_model)
    assert jnp.allclose(out_fast, ref, atol=1e-5, rtol=1e-5)
    assert jnp.allclose(out_hbm, ref, atol=1e-5, rtol=1e-5)

    print("KERNEL_OK")
</pallas_src>

<mosaic_0001>
module attributes {stable_mosaic.version = 11 : i64} {
  func.func @_embed_vmem_kernel(%arg0: i32, %arg1: memref<8x1xi32, #tpu.memory_space<vmem>>, %arg2: memref<32x32xf32, #tpu.memory_space<vmem>>, %arg3: memref<8x32xf32, #tpu.memory_space<vmem>>) attributes {dimension_semantics = [#tpu.dimension_semantics<parallel>], iteration_bounds = array<i64: 2>, scalar_prefetch = 0 : i64, scratch_operands = 0 : i64, tpu.core_type = #tpu.core_type<tc>, window_params = [{transform_indices = @transform_0, window_bounds = array<i64: 8, 1>}, {pipeline_mode = #tpu.pipeline_mode<synchronous>, transform_indices = @transform_1, window_bounds = array<i64: 32, 32>}, {transform_indices = @transform_2, window_bounds = array<i64: 8, 32>}]} {
    %c0 = arith.constant 0 : index
    %c0_0 = arith.constant 0 : index
    %0 = vector.load %arg1[%c0, %c0_0] : memref<8x1xi32, #tpu.memory_space<vmem>>, vector<8x1xi32>
    %1 = tpu.iota {dimensions = array<i32: 1>} : vector<8x32xi32>
    %2 = vector.broadcast %0 : vector<8x1xi32> to vector<8x32xi32>
    %3 = arith.cmpi eq, %1, %2 : vector<8x32xi32>
    %4 = arith.extui %3 : vector<8x32xi1> to vector<8x32xi32>
    %5 = arith.sitofp %4 : vector<8x32xi32> to vector<8x32xf32>
    %c0_1 = arith.constant 0 : index
    %c0_2 = arith.constant 0 : index
    %6 = vector.load %arg2[%c0_1, %c0_2] : memref<32x32xf32, #tpu.memory_space<vmem>>, vector<32x32xf32>
    %cst = arith.constant dense<0.000000e+00> : vector<8x32xf32>
    %7 = tpu.matmul %5, %6, %cst {dimension_numbers = #tpu.dot_dimension_numbers<[1], [0], [0], [1], [0, 0, 1, 1], [], []>} : vector<8x32xf32>, vector<32x32xf32>, vector<8x32xf32> -> vector<8x32xf32>
    %cst_3 = arith.constant 5.65685415 : f32
    %8 = vector.broadcast %cst_3 : f32 to vector<8x32xf32>
    %9 = arith.mulf %7, %8 : vector<8x32xf32>
    %c0_4 = arith.constant 0 : index
    %c0_5 = arith.constant 0 : index
    %10 = vector.load %arg3[%c0_4, %c0_5] : memref<8x32xf32, #tpu.memory_space<vmem>>, vector<8x32xf32>
    tpu.vector_store %arg3[%c0_4, %c0_5], %9 {strides = array<i32>} : memref<8x32xf32, #tpu.memory_space<vmem>>, vector<8x32xf32>,
    return
  }
  func.func @transform_0(%arg0: i32) -> (i32, i32) {
    %c0_i32 = arith.constant 0 : i32
    %c0_i32_0 = arith.constant 0 : i32
    return %arg0, %c0_i32 : i32, i32
  }
  func.func @transform_1(%arg0: i32) -> (i32, i32) {
    %c0_i32 = arith.constant 0 : i32
    %c0_i32_0 = arith.constant 0 : i32
    %c0_i32_1 = arith.constant 0 : i32
    return %c0_i32, %c0_i32_0 : i32, i32
  }
  func.func @transform_2(%arg0: i32) -> (i32, i32) {
    %c0_i32 = arith.constant 0 : i32
    %c0_i32_0 = arith.constant 0 : i32
    return %arg0, %c0_i32 : i32, i32
  }
}

</mosaic_0001>

<llo_original>
// kernel: tpu_custom_call.1
$region0: #{tpu_custom_call.1}
  #allocation0 [shape = 'u32[]', space=smem, size = 0x4, offset = 0x4, fixed_abs, tag = 'smem constant byte address 0x4 - core index']
  #allocation1 [shape = 'u32[72,128]{1,0:T(1,128)}', space=vmem, size = 0x9000, scoped, tag = 'internal scratch']
  %s0 = inlined_call_operand.vmem [shape: s32[16,1], index: 0, kind: input, shape index: {}]
  %s1 = inlined_call_operand.hbm [shape: f32[32,32], index: 1, kind: input, shape index: {}]
  %s2 = inlined_call_operand.hbm [shape: f32[16,32], index: 2, kind: output, shape index: {}]
  %s3 = sld [smem:[#allocation0]]
  $region45: #{tpu_custom_call.1} parent=0
    _
  %s5 = ssub.s32 1, %s3
  %s6 = scalar_select 0, %s5, %s3
  $region1: #{tpu_custom_call.1} parent=0
    #allocation2 [shape = 'u8[16384]{0}', space=vmem, size = 0x4000, scoped, tag = 'input window, operand 1, single buffered']
    #allocation3 [shape = 's32[2]{0}', space=sflag, size = 0x8, scoped, tag = 'scoped memory for tpu_custom_call.1']
    #allocation4 [shape = 's32[2]{0}', space=sflag, size = 0x8, scoped, tag = 'scoped memory for tpu_custom_call.1']
    #allocation5 [shape = 'u8[8192]{0}', space=vmem, size = 0x2000, scoped, tag = 'output window, operand 0']
    %7 = vsyncpa [#allocation3], 0
    %8 = vsyncpa [#allocation4], 0
    %s9 = scalar_lea.sflag [#allocation4], 1
    %10 = vsyncpa %s9, 0
    loop: start=0, step=1, limit=4
    $region2: #{tpu_custom_call.1} parent=1 // loop_pre_header
      _
    $region3: #{tpu_custom_call.1} parent=1 // loop_header
      %s12 = sphi 0, %s16
      %p13 = scmp.ge.s32.totalorder %s12, 4
      %s22 = sphi 0, %s24
      %s25 = sphi 0, %s22
      %s26 = sphi 0, %s25
      %s42 = sphi 0, %s26
      %s46 = sphi 0, %s46
      %s48 = sphi 0, %s46
      %s49 = sphi 0, %s48
      %s63 = sphi 0, %s49
      %s69 = sphi 0, %s71
      %s72 = sphi 0, %s69
      %s73 = sphi 0, %s72
      %s89 = sphi 0, %s73
    $region4: #{tpu_custom_call.1} parent=1 // loop_header_branch
      %15 = sbr.rel (%p13) target = $region8
    $region5: #{tpu_custom_call.1} parent=1 // loop_body
      %s17 = ssub.s32 %s12, 1
      %s18 = ssub.s32 %s12, 2
      %s19 = sadd.s32 %s12, 1
      %s20 = ssub.s32 %s12, %s19
      %p21 = scmp.eq.s32.totalorder %s20, 0
      %s23 = sadd.s32 %s22, 1
      %s24 = scalar_select %p21, %s22, %s23
      %p27 = pneg %p21
      %p28 = scmp.eq.s32.totalorder %s12, 1
      %p29 = por %p27, %p28
      %p30 = scmp.ne.s32.totalorder %s22, %s25
      %p31 = scmp.eq.s32.totalorder %s12, 0
      %p32 = por %p30, %p31
      %p33 = scmp.ne.s32.totalorder %s22, %s25
      %p34 = scmp.eq.s32.totalorder %s17, 1
      %p35 = por %p33, %p34
      %p36 = scmp.ne.s32.totalorder %s25, %s26
      %p37 = scmp.eq.s32.totalorder %s17, 0
      %p38 = por %p36, %p37
      %p39 = scmp.ne.s32.totalorder %s25, %s26
      %p40 = scmp.eq.s32.totalorder %s18, 1
      %p41 = por %p39, %p40
      %p43 = scmp.ne.s32.totalorder %s26, %s42
      %p44 = scmp.eq.s32.totalorder %s18, 0
      %p45 = por %p43, %p44
      %s47 = sadd.s32 %s46, 1
      %p50 = scmp.eq.s32.totalorder %s12, 1
      %p51 = scmp.ne.s32.totalorder %s46, %s48
      %p52 = scmp.eq.s32.totalorder %s12, 0
      %p53 = por %p51, %p52
      %p54 = scmp.ne.s32.totalorder %s46, %s48
      %p55 = scmp.eq.s32.totalorder %s17, 1
      %p56 = por %p54, %p55
      %p57 = scmp.ne.s32.totalorder %s48, %s49
      %p58 = scmp.eq.s32.totalorder %s17, 0
      %p59 = por %p57, %p58
      %p60 = scmp.ne.s32.totalorder %s48, %s49
      %p61 = scmp.eq.s32.totalorder %s18, 1
      %p62 = por %p60, %p61
      %p64 = scmp.ne.s32.totalorder %s49, %s63
      %p65 = scmp.eq.s32.totalorder %s18, 0
      %p66 = por %p64, %p65
      %s67 = ssub.s32 %s12, %s19
      %p68 = scmp.eq.s32.totalorder %s67, 0
      %s70 = sadd.s32 %s69, 1
      %s71 = scalar_select %p68, %s69, %s70
      %p74 = pneg %p68
      %p75 = scmp.eq.s32.totalorder %s12, 1
      %p76 = por %p74, %p75
      %p77 = scmp.ne.s32.totalorder %s69, %s72
      %p78 = scmp.eq.s32.totalorder %s12, 0
      %p79 = por %p77, %p78
      %p80 = scmp.ne.s32.totalorder %s69, %s72
      %p81 = scmp.eq.s32.totalorder %s17, 1
      %p82 = por %p80, %p81
      %p83 = scmp.ne.s32.totalorder %s72, %s73
      %p84 = scmp.eq.s32.totalorder %s17, 0
      %p85 = por %p83, %p84
      %p86 = scmp.ne.s32.totalorder %s72, %s73
      %p87 = scmp.eq.s32.totalorder %s18, 1
      %p88 = por %p86, %p87
      %p90 = scmp.ne.s32.totalorder %s73, %s89
      %p91 = scmp.eq.s32.totalorder %s18, 0
      %p92 = por %p90, %p91
      %p93 = scmp.le.s32.totalorder 1, %s12
      %p94 = scmp.lt.s32.totalorder %s12, 3
      %p95 = pnand %p93, %p94
      %p96 = pneg %p95
      // Predicated region
      $region9: #{tpu_custom_call.1} parent=5 // pred_check
        _
      $region10: #{tpu_custom_call.1} parent=5 // pred_check_branch
        %98 = sbr.rel (%p95) target = $region12
      $region11: #{tpu_custom_call.1} parent=5 // pred_region
        %s99 = ssub.s32 %s12, 1
        // Predicated region
        $region13: #{tpu_custom_call.1} parent=11 // pred_check
          %p100 = pneg %p59
        $region14: #{tpu_custom_call.1} parent=11 // pred_check_branch
          %102 = sbr.rel (%p100) target = $region16
        $region15: #{tpu_custom_call.1} parent=11 // pred_region
          %104 = vsyncadd [#allocation3], 0
          %s105 = sshll.u32 %s1, 4
          %s106 = int_to_ptr.hbm [resolvable:$true] %s105
          %s107 = sshll.u32 [#allocation2], 4
          %s108 = int_to_ptr.vmem [resolvable:$true] %s107
          %113 = dma.hbm_to_vmem [thread:$0]  %s106, 512, %s108, [#allocation3], 128, 128, 8
        $region16: #{tpu_custom_call.1} parent=11 // pred_fallthru
          _
      $region12: #{tpu_custom_call.1} parent=5 // pred_fallthru
        _
      %p114 = scmp.lt.s32.totalorder %s12, 2
      // Predicated region
      $region17: #{tpu_custom_call.1} parent=5 // pred_check
        %p115 = pneg %p114
      $region18: #{tpu_custom_call.1} parent=5 // pred_check_branch
        %117 = sbr.rel (%p115) target = $region20
      $region19: #{tpu_custom_call.1} parent=5 // pred_region
        // Predicated region
        $region21: #{tpu_custom_call.1} parent=19 // pred_check
          %p118 = pneg %p32
        $region22: #{tpu_custom_call.1} parent=19 // pred_check_branch
          %120 = sbr.rel (%p118) target = $region24
        $region23: #{tpu_custom_call.1} parent=19 // pred_region
          %p121 = scmp.lt.s32.totalorder %s12, 1
          %s122 = scalar_select %p121, %s12, 1
          %s123 = smul.addr %s122, 8
          %s124 = scalar_lea.vmem %s0, %s123
        $region24: #{tpu_custom_call.1} parent=19 // pred_fallthru
          _
      $region20: #{tpu_custom_call.1} parent=5 // pred_fallthru
        _
      %p125 = scmp.le.s32.totalorder 1, %s12
      %p126 = scmp.lt.s32.totalorder %s12, 3
      %p127 = pnand %p125, %p126
      %p128 = pneg %p127
      // Predicated region
      $region25: #{tpu_custom_call.1} parent=5 // pred_check
        _
      $region26: #{tpu_custom_call.1} parent=5 // pred_check_branch
        %130 = sbr.rel (%p127) target = $region28
      $region27: #{tpu_custom_call.1} parent=5 // pred_region
        %s131 = ssub.s32 %s12, 1
        // Predicated region
        $region29: #{tpu_custom_call.1} parent=27 // pred_check
          %p132 = pneg %p59
        $region30: #{tpu_custom_call.1} parent=27 // pred_check_branch
          %134 = sbr.rel (%p132) target = $region32
        $region31: #{tpu_custom_call.1} parent=27 // pred_region
          %136 = dma.done [#allocation3], 512
        $region32: #{tpu_custom_call.1} parent=27 // pred_fallthru
          _
        %p137 = scmp.lt.s32.totalorder %s17, 1
        %s138 = scalar_select %p137, %s17, 1
        %s139 = smul.addr %s138, 8
        %s140 = scalar_lea.vmem %s0, %s139
        %p141 = pneg %p38
        %p142 = pneg %p35
        %p143 = pneg %p59
        %p144 = pneg %p56
        %p145 = pneg %p85
        %p146 = pneg %p82
        %s147 = sand.u32 %s72, 1
        %s148 = scalar_lea.sflag [#allocation4], %s147
        %s149 = sand.u32 %s72, 1
        %s150 = smul.addr %s149, 8
        %s151 = scalar_lea.vmem [#allocation5], %s150
        %p152 = scmp.lt.s32.totalorder %s17, 1
        %s153 = scalar_select %p152, %s17, 1
        %s154 = smul.addr %s153, 8
        %s155 = scalar_lea.vmem %s0, %s154
        %v156 = vld [vmem:[%s155] sm:$0xff]
        %v157 = vlaneseq
        %v158 = vand.u32 %v157, 127
        %159 = vset.pattern.permute.xlu0 0
        %160 = vperm.xlu0 %159, %v156
        %v161 = vpop.permute.xlu0 %160
        %vm162 = vcmp.eq.s32.totalorder %v158, %v161
        %v163 = vsel %vm162, 1, 0
        %v164 = vcvt.s32.f32 %v163
        %v165 = vld [vmem:[#allocation2] sm:$0xff]
        %v166 = vld [vmem:[#allocation2 + $0x8] sm:$0xff]
        %v167 = vld [vmem:[#allocation2 + $0x10] sm:$0xff]
        %v168 = vld [vmem:[#allocation2 + $0x18] sm:$0xff]
        %vm169 = vcmask 261120
        %v171 = vsel %vm169, %v164, 0
        %173 = vmatpush.msra.mxu0 0.0
        %174 = vmatpush.msra.mxu0 0.0
        %175 = vmatpush.msra.mxu0 0.0
        %176 = vmatpush.msra.mxu0 0.0
        %177 = vmatpush.msra.mxu0 0.0
        %178 = vmatpush.msra.mxu0 0.0
        %179 = vmatpush.msra.mxu0 0.0
        %180 = vmatpush.msra.mxu0 0.0
        %181 = vmatpush.msra.mxu0 0.0
        %182 = vmatpush.msra.mxu0 0.0
        %183 = vmatpush.msra.mxu0 0.0
        %184 = vmatpush.msra.mxu0 0.0
        %185 = vmatpush.msra.mxu0 %v168
        %186 = vmatpush.msra.mxu0 %v167
        %187 = vmatpush.msra.mxu0 %v166
        %188 = vmatpush.msra.mxu0 %v165
        %189 = vmatmul.f32.gmra.mxu0 %v171
        %v190 = vpop.f32.mrf.mxu0
        %v191 = vadd.f32 0.0, %v190
        %192 = vdwg.mxu0
        %v193 = vmul.f32 %v191, 5.656854
        %194 = vst.msk [vmem:[%s151] sm:$0xff] %vm169, %v193
        %s195 = sand.u32 %s72, 1
        %s196 = scalar_lea.sflag [#allocation4], %s195
        %s197 = sand.u32 %s72, 1
        %s198 = smul.addr %s197, 8
        %s199 = scalar_lea.vmem [#allocation5], %s198
        // Predicated region
        $region33: #{tpu_custom_call.1} parent=27 // pred_check
          %p200 = pneg %p82
        $region34: #{tpu_custom_call.1} parent=27 // pred_check_branch
          %202 = sbr.rel (%p200) target = $region36
        $region35: #{tpu_custom_call.1} parent=27 // pred_region
          %204 = vsyncadd %s196, 0
          %s205 = smul.addr %s17, 8
          %s206 = scalar_lea.hbm %s2, %s205
          %s208 = sshll.u32 %s199, 4
          %s209 = int_to_ptr.vmem [resolvable:$true] %s208
          %s210 = sshll.u32 %s206, 4
          %s211 = int_to_ptr.hbm [resolvable:$true] %s210
          %213 = dma.vmem_to_hbm [thread:$0]  %s209, 128, %s211, %s196
        $region36: #{tpu_custom_call.1} parent=27 // pred_fallthru
          _
      $region28: #{tpu_custom_call.1} parent=5 // pred_fallthru
        _
      %p214 = scmp.le.s32.totalorder 2, %s12
      // Predicated region
      $region37: #{tpu_custom_call.1} parent=5 // pred_check
        %p215 = pneg %p214
      $region38: #{tpu_custom_call.1} parent=5 // pred_check_branch
        %217 = sbr.rel (%p215) target = $region40
      $region39: #{tpu_custom_call.1} parent=5 // pred_region
        %s218 = ssub.s32 %s12, 2
        // Predicated region
        $region41: #{tpu_custom_call.1} parent=39 // pred_check
          %p219 = pneg %p88
        $region42: #{tpu_custom_call.1} parent=39 // pred_check_branch
          %221 = sbr.rel (%p219) target = $region44
        $region43: #{tpu_custom_call.1} parent=39 // pred_region
          %s222 = sand.u32 %s73, 1
          %s223 = scalar_lea.sflag [#allocation4], %s222
          %s224 = sand.u32 %s73, 1
          %s225 = smul.addr %s224, 8
          %s226 = scalar_lea.vmem [#allocation5], %s225
          %228 = dma.done %s223, 128
        $region44: #{tpu_custom_call.1} parent=39 // pred_fallthru
          _
      $region40: #{tpu_custom_call.1} parent=5 // pred_fallthru
        _
    $region6: #{tpu_custom_call.1} parent=1 // loop_footer
      %s16 = sadd.s32 1, %s12
    $region7: #{tpu_custom_call.1} parent=1 // loop_footer_branch
      %11 = sbr.rel target = $region3
    $region8: #{tpu_custom_call.1} parent=1 // loop_exit
      _
    %229 = vsyncpa [#allocation3], 1
    %s230 = scalar_lea.sflag [#allocation3], 1
    %231 = vsyncpa %s230, 1
    %232 = vsyncpa [#allocation4], 1
    %s233 = scalar_lea.sflag [#allocation4], 1
    %234 = vsyncpa %s233, 1

</llo_original>
